<compile_context>
chip_gen: v7x
topology: tpu7x:2x2x1
jax: 0.10.0
libtpu: 0.0.40
codegen_flags: <defaults>
</compile_context>

<pallas_src>
import functools

import jax
import jax.numpy as jnp
from jax.experimental import pallas as pl
from jax.experimental.pallas import tpu as pltpu


def _round_up(x, m):
    return ((x + m - 1) // m) * m


def _mlp_softmax_kernel(x_ref, w1_ref, b1_ref, w2_ref, b2_ref, w3_ref, b3_ref,
                        o_ref):
    """Fused 3-layer MLP + ReLU + softmax on one batch row-tile.

    x_ref : (TILE_B, d)        float32 (cast to bf16 in-kernel for the MXU)
    w1    : (d, 16)  bfloat16   b1: (1, 16)  f32
    w2    : (16, 32) f32        b2: (1, 32)  f32
    w3    : (32, Q_PAD) f32     b3: (1, Q_PAD) f32 (padded cols = -1e30)
    o_ref : (TILE_B, Q_PAD)     bfloat16 softmax probs (padded cols ~ 0)
    """
    # Layer 1: cast x to bf16 right before the dot (VPU work hidden under the
    # x DMA); bf16 MXU matmul with f32 accumulation.
    x_bf = x_ref[...].astype(jnp.bfloat16)
    h1 = jnp.dot(x_bf, w1_ref[...], preferred_element_type=jnp.float32)
    h1 = jnp.maximum(h1 + b1_ref[...], 0.0)
    # TODO(synk): training-mode Dropout2d(p=0.2) (PRNG mask + 1/(1-p) scale)
    # not implemented; inference semantics (identity) are used.

    # Layer 2 + ReLU (f32 throughout; negligible vs. the x DMA).
    h2 = jnp.dot(h1, w2_ref[...], preferred_element_type=jnp.float32)
    h2 = jnp.maximum(h2 + b2_ref[...], 0.0)

    # Output layer + softmax over the 128-lane-padded class dim.  Padded
    # columns have zero weights and bias -1e30, so exp() underflows to 0 and
    # they contribute nothing to the denominator.
    logits = jnp.dot(h2, w3_ref[...], preferred_element_type=jnp.float32)
    logits = logits + b3_ref[...]
    m = jnp.max(logits, axis=-1, keepdims=True)
    e = jnp.exp(logits - m)
    denom = jnp.sum(e, axis=-1, keepdims=True)
    probs = e * pl.reciprocal(denom, approx=False)
    o_ref[...] = probs.astype(o_ref.dtype)


def _choose_tile_b(B, cap):
    """Row-tile size with zero HBM padding copies.

    Returns (tile_b, n_tiles).  tile_b is either == B (single full-extent
    block) or a multiple of 16 (bf16 sublane packing; Pallas masks the
    partial last block).  Targets >= 2 grid steps when B allows it so the
    'parallel' batch axis shards across both v7x TensorCores (no-op on
    v5e/v6e, which have a single TC).
    """
    cap = max(16, (cap // 16) * 16)
    if B <= 16:
        return B, 1
    tile = min(cap, _round_up(pl.cdiv(B, 2), 16))
    return tile, pl.cdiv(B, tile)


@functools.partial(jax.jit, static_argnames=("q", "tile_b_cap"))
def _net_forward_jit(x_nchw, prepped, *, q, tile_b_cap):
    w1_bf, b1, w2, b2, w3p, b3p = prepped
    B = x_nchw.shape[0]
    d = w1_bf.shape[0]
    q_pad = w3p.shape[1]

    # glue: flatten exactly like x.view(x.size(0), -1); x stays f32 in HBM
    # (the bf16 cast happens inside the kernel -> single HBM pass over x).
    x2d = x_nchw.reshape(B, -1).astype(jnp.float32)
    assert x2d.shape[1] == d, (x2d.shape, d)

    tile_b, n_tiles = _choose_tile_b(B, tile_b_cap)

    out = pl.pallas_call(
        _mlp_softmax_kernel,
        out_shape=jax.ShapeDtypeStruct((B, q_pad), jnp.bfloat16),
        grid=(n_tiles,),
        in_specs=[
            pl.BlockSpec((tile_b, d), lambda i: (i, 0)),   # x: row-tiled
            pl.BlockSpec((d, 16), lambda i: (0, 0)),       # weights/biases
            pl.BlockSpec((1, 16), lambda i: (0, 0)),       # stay resident
            pl.BlockSpec((16, 32), lambda i: (0, 0)),      # across grid steps
            pl.BlockSpec((1, 32), lambda i: (0, 0)),
            pl.BlockSpec((32, q_pad), lambda i: (0, 0)),
            pl.BlockSpec((1, q_pad), lambda i: (0, 0)),
        ],
        out_specs=pl.BlockSpec((tile_b, q_pad), lambda i: (i, 0)),
        compiler_params=pltpu.CompilerParams(
            dimension_semantics=("parallel",),
            vmem_limit_bytes=48 * 1024 * 1024),
    )(x2d, w1_bf, b1, w2, b2, w3p, b3p)

    # Drop the lane padding of the class dim; upcast to f32 for the consumer.
    return out[:, :q].astype(jnp.float32)


def net_forward(x_nchw, prepped_params, q, tile_b_cap=2048):
    """Forward pass of `Net`. x_nchw: (B, C, H, W); prepped_params from
    prepare_params(); q = number of classes."""
    return _net_forward_jit(x_nchw, prepped_params, q=q, tile_b_cap=tile_b_cap)


def prepare_params(params):
    """One-time, hoisted-out-of-the-call-path parameter prep:
    bf16 cast of w1 and 128-lane padding of the output layer (padded bias
    entries = -1e30 so padded logits vanish in the softmax)."""
    w1, b1, w2, b2, w3, b3 = params
    q = w3.shape[1]
    q_pad = _round_up(q, 128)
    w1_bf = w1.astype(jnp.bfloat16)
    w3p = jnp.pad(w3, ((0, 0), (0, q_pad - q)))
    b3p = jnp.pad(b3, ((0, 0), (0, q_pad - q)), constant_values=-1e30)
    return (w1_bf, b1, w2, b2, w3p, b3p), q


def init_params(key, d, q):
    """Deterministic parameter init (shapes match nn.Linear(d,16)/(16,32)/(32,q)).

    Weights are created as (in, out) — the transpose of PyTorch's (out, in)
    storage — so the kernel computes x @ W + b directly.
    """
    ks = jax.random.split(key, 6)

    def linear(kw, kb, fan_in, fan_out):
        bound = 1.0 / jnp.sqrt(jnp.float32(fan_in))
        w = jax.random.uniform(kw, (fan_in, fan_out), jnp.float32, -bound, bound)
        b = jax.random.uniform(kb, (1, fan_out), jnp.float32, -bound, bound)
        return w, b

    w1, b1 = linear(ks[0], ks[1], d, 16)
    w2, b2 = linear(ks[2], ks[3], 16, 32)
    w3, b3 = linear(ks[4], ks[5], 32, q)
    return (w1, b1, w2, b2, w3, b3)


if __name__ == "__main__":
    key = jax.random.PRNGKey(0)
    k_x, k_p = jax.random.split(key)

    # Small shapes: B=2, C=4, H=W=16  =>  d = 4*16*16 = 1024, q = 10 classes.
    B, C, H, W = 2, 4, 16, 16
    d = C * H * W
    q = 10

    x = jax.random.normal(k_x, (B, C, H, W), dtype=jnp.float32)
    params = init_params(k_p, d, q)
    prepped, q_classes = prepare_params(params)

    out = net_forward(x, prepped, q_classes)
    out = jax.block_until_ready(out)

    # sanity: shape, softmax rows sum to ~1, and match a pure-JAX f32 reference
    # (bf16 x/w1 on the MXU and bf16 output store -> loose tolerance).
    assert out.shape == (B, q)
    assert jnp.allclose(jnp.sum(out, axis=-1), 1.0, atol=2e-2)

    w1, b1, w2, b2, w3, b3 = params
    x2d = x.reshape(B, -1)
    ref = jax.nn.softmax(
        jnp.maximum(jnp.maximum(x2d @ w1 + b1, 0.0) @ w2 + b2, 0.0) @ w3 + b3,
        axis=-1)
    assert jnp.allclose(out, ref, atol=2e-2), float(jnp.max(jnp.abs(out - ref)))

    print("KERNEL_OK")
</pallas_src>

<mosaic_0001>
module attributes {stable_mosaic.version = 11 : i64} {
  func.func @_mlp_softmax_kernel(%arg0: i32, %arg1: memref<2x1024xf32, #tpu.memory_space<vmem>>, %arg2: memref<1024x16xbf16, #tpu.memory_space<vmem>>, %arg3: memref<1x16xf32, #tpu.memory_space<vmem>>, %arg4: memref<16x32xf32, #tpu.memory_space<vmem>>, %arg5: memref<1x32xf32, #tpu.memory_space<vmem>>, %arg6: memref<32x128xf32, #tpu.memory_space<vmem>>, %arg7: memref<1x128xf32, #tpu.memory_space<vmem>>, %arg8: memref<2x128xbf16, #tpu.memory_space<vmem>>) attributes {dimension_semantics = [#tpu.dimension_semantics<parallel>], iteration_bounds = array<i64: 1>, scalar_prefetch = 0 : i64, scratch_operands = 0 : i64, tpu.core_type = #tpu.core_type<tc>, window_params = [{transform_indices = @transform_0, window_bounds = array<i64: 2, 1024>}, {pipeline_mode = #tpu.pipeline_mode<synchronous>, transform_indices = @transform_1, window_bounds = array<i64: 1024, 16>}, {pipeline_mode = #tpu.pipeline_mode<synchronous>, transform_indices = @transform_2, window_bounds = array<i64: 1, 16>}, {pipeline_mode = #tpu.pipeline_mode<synchronous>, transform_indices = @transform_3, window_bounds = array<i64: 16, 32>}, {pipeline_mode = #tpu.pipeline_mode<synchronous>, transform_indices = @transform_4, window_bounds = array<i64: 1, 32>}, {pipeline_mode = #tpu.pipeline_mode<synchronous>, transform_indices = @transform_5, window_bounds = array<i64: 32, 128>}, {pipeline_mode = #tpu.pipeline_mode<synchronous>, transform_indices = @transform_6, window_bounds = array<i64: 1, 128>}, {transform_indices = @transform_7, window_bounds = array<i64: 2, 128>}]} {
    %c0 = arith.constant 0 : index
    %c0_0 = arith.constant 0 : index
    %0 = vector.load %arg1[%c0, %c0_0] : memref<2x1024xf32, #tpu.memory_space<vmem>>, vector<2x1024xf32>
    %1 = arith.truncf %0 : vector<2x1024xf32> to vector<2x1024xbf16>
    %c0_1 = arith.constant 0 : index
    %c0_2 = arith.constant 0 : index
    %2 = vector.load %arg2[%c0_1, %c0_2] : memref<1024x16xbf16, #tpu.memory_space<vmem>>, vector<1024x16xbf16>
    %cst = arith.constant dense<0.000000e+00> : vector<2x16xf32>
    %3 = tpu.matmul %1, %2, %cst {dimension_numbers = #tpu.dot_dimension_numbers<[1], [0], [0], [1], [0, 0, 1, 1], [], []>} : vector<2x1024xbf16>, vector<1024x16xbf16>, vector<2x16xf32> -> vector<2x16xf32>
    %c0_3 = arith.constant 0 : index
    %c0_4 = arith.constant 0 : index
    %4 = vector.load %arg3[%c0_3, %c0_4] : memref<1x16xf32, #tpu.memory_space<vmem>>, vector<1x16xf32>
    %5 = vector.broadcast %4 : vector<1x16xf32> to vector<2x16xf32>
    %6 = arith.addf %3, %5 : vector<2x16xf32>
    %cst_5 = arith.constant 0.000000e+00 : f32
    %7 = vector.broadcast %cst_5 : f32 to vector<2x16xf32>
    %8 = arith.maximumf %6, %7 : vector<2x16xf32>
    %c0_6 = arith.constant 0 : index
    %c0_7 = arith.constant 0 : index
    %9 = vector.load %arg4[%c0_6, %c0_7] : memref<16x32xf32, #tpu.memory_space<vmem>>, vector<16x32xf32>
    %cst_8 = arith.constant dense<0.000000e+00> : vector<2x32xf32>
    %10 = tpu.matmul %8, %9, %cst_8 {dimension_numbers = #tpu.dot_dimension_numbers<[1], [0], [0], [1], [0, 0, 1, 1], [], []>} : vector<2x16xf32>, vector<16x32xf32>, vector<2x32xf32> -> vector<2x32xf32>
    %c0_9 = arith.constant 0 : index
    %c0_10 = arith.constant 0 : index
    %11 = vector.load %arg5[%c0_9, %c0_10] : memref<1x32xf32, #tpu.memory_space<vmem>>, vector<1x32xf32>
    %12 = vector.broadcast %11 : vector<1x32xf32> to vector<2x32xf32>
    %13 = arith.addf %10, %12 : vector<2x32xf32>
    %cst_11 = arith.constant 0.000000e+00 : f32
    %14 = vector.broadcast %cst_11 : f32 to vector<2x32xf32>
    %15 = arith.maximumf %13, %14 : vector<2x32xf32>
    %c0_12 = arith.constant 0 : index
    %c0_13 = arith.constant 0 : index
    %16 = vector.load %arg6[%c0_12, %c0_13] : memref<32x128xf32, #tpu.memory_space<vmem>>, vector<32x128xf32>
    %cst_14 = arith.constant dense<0.000000e+00> : vector<2x128xf32>
    %17 = tpu.matmul %15, %16, %cst_14 {dimension_numbers = #tpu.dot_dimension_numbers<[1], [0], [0], [1], [0, 0, 1, 1], [], []>} : vector<2x32xf32>, vector<32x128xf32>, vector<2x128xf32> -> vector<2x128xf32>
    %c0_15 = arith.constant 0 : index
    %c0_16 = arith.constant 0 : index
    %18 = vector.load %arg7[%c0_15, %c0_16] : memref<1x128xf32, #tpu.memory_space<vmem>>, vector<1x128xf32>
    %19 = vector.broadcast %18 : vector<1x128xf32> to vector<2x128xf32>
    %20 = arith.addf %17, %19 : vector<2x128xf32>
    %cst_17 = arith.constant dense<0xFF800000> : vector<2xf32>
    %21 = vector.multi_reduction <maximumf>, %20, %cst_17 [1] : vector<2x128xf32> to vector<2xf32>
    %22 = vector.shape_cast %21 : vector<2xf32> to vector<2x1xf32>
    %23 = vector.broadcast %22 : vector<2x1xf32> to vector<2x128xf32>
    %24 = arith.subf %20, %23 : vector<2x128xf32>
    %25 = math.exp %24 : vector<2x128xf32>
    %cst_18 = arith.constant dense<0.000000e+00> : vector<2xf32>
    %26 = vector.multi_reduction <add>, %25, %cst_18 [1] : vector<2x128xf32> to vector<2xf32>
    %27 = vector.shape_cast %26 : vector<2xf32> to vector<2x1xf32>
    %28 = tpu.reciprocal %27 : vector<2x1xf32> -> vector<2x1xf32>
    %29 = vector.broadcast %28 : vector<2x1xf32> to vector<2x128xf32>
    %30 = arith.mulf %25, %29 : vector<2x128xf32>
    %31 = arith.truncf %30 : vector<2x128xf32> to vector<2x128xbf16>
    %c0_19 = arith.constant 0 : index
    %c0_20 = arith.constant 0 : index
    %32 = vector.load %arg8[%c0_19, %c0_20] : memref<2x128xbf16, #tpu.memory_space<vmem>>, vector<2x128xbf16>
    tpu.vector_store %arg8[%c0_19, %c0_20], %31 {strides = array<i32>} : memref<2x128xbf16, #tpu.memory_space<vmem>>, vector<2x128xbf16>,
    return
  }
  func.func @transform_0(%arg0: i32) -> (i32, i32) {
    %c0_i32 = arith.constant 0 : i32
    %c0_i32_0 = arith.constant 0 : i32
    return %arg0, %c0_i32 : i32, i32
  }
  func.func @transform_1(%arg0: i32) -> (i32, i32) {
    %c0_i32 = arith.constant 0 : i32
    %c0_i32_0 = arith.constant 0 : i32
    %c0_i32_1 = arith.constant 0 : i32
    return %c0_i32, %c0_i32_0 : i32, i32
  }
  func.func @transform_2(%arg0: i32) -> (i32, i32) {
    %c0_i32 = arith.constant 0 : i32
    %c0_i32_0 = arith.constant 0 : i32
    %c0_i32_1 = arith.constant 0 : i32
    return %c0_i32, %c0_i32_0 : i32, i32
  }
  func.func @transform_3(%arg0: i32) -> (i32, i32) {
    %c0_i32 = arith.constant 0 : i32
    %c0_i32_0 = arith.constant 0 : i32
    %c0_i32_1 = arith.constant 0 : i32
    return %c0_i32, %c0_i32_0 : i32, i32
  }
  func.func @transform_4(%arg0: i32) -> (i32, i32) {
    %c0_i32 = arith.constant 0 : i32
    %c0_i32_0 = arith.constant 0 : i32
    %c0_i32_1 = arith.constant 0 : i32
    return %c0_i32, %c0_i32_0 : i32, i32
  }
  func.func @transform_5(%arg0: i32) -> (i32, i32) {
    %c0_i32 = arith.constant 0 : i32
    %c0_i32_0 = arith.constant 0 : i32
    %c0_i32_1 = arith.constant 0 : i32
    return %c0_i32, %c0_i32_0 : i32, i32
  }
  func.func @transform_6(%arg0: i32) -> (i32, i32) {
    %c0_i32 = arith.constant 0 : i32
    %c0_i32_0 = arith.constant 0 : i32
    %c0_i32_1 = arith.constant 0 : i32
    return %c0_i32, %c0_i32_0 : i32, i32
  }
  func.func @transform_7(%arg0: i32) -> (i32, i32) {
    %c0_i32 = arith.constant 0 : i32
    %c0_i32_0 = arith.constant 0 : i32
    return %arg0, %c0_i32 : i32, i32
  }
}

</mosaic_0001>

<llo_original>
// kernel: _net_forward_jit.1
$region0: #{_net_forward_jit.1}
  #allocation0 [shape = 'u32[]', space=smem, size = 0x4, offset = 0x4, fixed_abs, tag = 'smem constant byte address 0x4 - core index']
  #allocation1 [shape = 'u32[144,128]{1,0:T(1,128)}', space=vmem, size = 0x12000, scoped, tag = 'internal scratch']
  %s0 = inlined_call_operand.vmem [shape: f32[2,1024], index: 0, kind: input, shape index: {}]
  %s1 = inlined_call_operand.vmem [shape: bf16[1024,16], index: 1, kind: input, shape index: {}]
  %s2 = inlined_call_operand.vmem [shape: f32[1,16], index: 2, kind: input, shape index: {}]
  %s3 = inlined_call_operand.vmem [shape: f32[16,32], index: 3, kind: input, shape index: {}]
  %s4 = inlined_call_operand.vmem [shape: f32[1,32], index: 4, kind: input, shape index: {}]
  %s5 = inlined_call_operand.vmem [shape: f32[32,128], index: 5, kind: input, shape index: {}]
  %s6 = inlined_call_operand.vmem [shape: f32[1,128], index: 6, kind: input, shape index: {}]
  %s7 = inlined_call_operand.vmem [shape: bf16[2,128], index: 7, kind: output, shape index: {}]
  %s8 = sld [smem:[#allocation0]]
  $region38: #{_net_forward_jit.1} parent=0
    _
  %s10 = ssub.s32 1, %s8
  %s11 = scalar_select 0, %s10, %s8
  // Predicated region
  $region2: #{_net_forward_jit.1} parent=0 // pred_check
    _
  $region3: #{_net_forward_jit.1} parent=0 // pred_check_branch
    %13 = sbr.rel (0) target = $region5
  $region4: #{_net_forward_jit.1} parent=0 // pred_region
    _
  $region5: #{_net_forward_jit.1} parent=0 // pred_fallthru
    _
  // Predicated region
  $region6: #{_net_forward_jit.1} parent=0 // pred_check
    _
  $region7: #{_net_forward_jit.1} parent=0 // pred_check_branch
    %15 = sbr.rel (0) target = $region9
  $region8: #{_net_forward_jit.1} parent=0 // pred_region
    _
  $region9: #{_net_forward_jit.1} parent=0 // pred_fallthru
    _
  // Predicated region
  $region10: #{_net_forward_jit.1} parent=0 // pred_check
    _
  $region11: #{_net_forward_jit.1} parent=0 // pred_check_branch
    %17 = sbr.rel (0) target = $region13
  $region12: #{_net_forward_jit.1} parent=0 // pred_region
    _
  $region13: #{_net_forward_jit.1} parent=0 // pred_fallthru
    _
  // Predicated region
  $region14: #{_net_forward_jit.1} parent=0 // pred_check
    _
  $region15: #{_net_forward_jit.1} parent=0 // pred_check_branch
    %19 = sbr.rel (0) target = $region17
  $region16: #{_net_forward_jit.1} parent=0 // pred_region
    _
  $region17: #{_net_forward_jit.1} parent=0 // pred_fallthru
    _
  // Predicated region
  $region18: #{_net_forward_jit.1} parent=0 // pred_check
    _
  $region19: #{_net_forward_jit.1} parent=0 // pred_check_branch
    %21 = sbr.rel (0) target = $region21
  $region20: #{_net_forward_jit.1} parent=0 // pred_region
    _
  $region21: #{_net_forward_jit.1} parent=0 // pred_fallthru
    _
  // Predicated region
  $region22: #{_net_forward_jit.1} parent=0 // pred_check
    _
  $region23: #{_net_forward_jit.1} parent=0 // pred_check_branch
    %23 = sbr.rel (0) target = $region25
  $region24: #{_net_forward_jit.1} parent=0 // pred_region
    _
  $region25: #{_net_forward_jit.1} parent=0 // pred_fallthru
    _
  // Predicated region
  $region26: #{_net_forward_jit.1} parent=0 // pred_check
    _
  $region27: #{_net_forward_jit.1} parent=0 // pred_check_branch
    %25 = sbr.rel (0) target = $region29
  $region28: #{_net_forward_jit.1} parent=0 // pred_region
    _
  $region29: #{_net_forward_jit.1} parent=0 // pred_fallthru
    _
  %v27 = vld [vmem:[%s0] sm:$0xff]
  %v28 = vld [vmem:[%s0 + $0x8] sm:$0xff]
  %v31 = vcombine.high %v27, %v27
  %v33 = vunpack.c.l.s4 1983009808
  %v34 = vunpack.c.0.s8 %v33
  %v35 = vlaneseq
  %v36 = vshrl.u32 %v35, 7
  %v37 = vsub.s32 %v34, %v36
  %v38 = vrot.slane %v27, %v37
  %v40 = vunpack.c.l.s4 1983009808
  %v41 = vunpack.c.0.s8 %v40
  %v42 = vlaneseq
  %v43 = vshrl.u32 %v42, 7
  %v44 = vsub.s32 %v41, %v43
  %v45 = vrot.slane %v31, %v44
  %v46 = vcombine.high %v38, %v38
  %v47 = vcombine.high %v45, %v45
  %v48 = vcombine.high %v28, %v28
  %v50 = vunpack.c.l.s4 1983009808
  %v51 = vunpack.c.0.s8 %v50
  %v52 = vlaneseq
  %v53 = vshrl.u32 %v52, 7
  %v54 = vsub.s32 %v51, %v53
  %v55 = vrot.slane %v28, %v54
  %v57 = vunpack.c.l.s4 1983009808
  %v58 = vunpack.c.0.s8 %v57
  %v59 = vlaneseq
  %v60 = vshrl.u32 %v59, 7
  %v61 = vsub.s32 %v58, %v60
  %v62 = vrot.slane %v48, %v61
  %v63 = vcombine.high %v55, %v55
  %v64 = vcombine.high %v62, %v62
  %v73 = vpack.c.bf16 %v38, %v38
  %v74 = vpack.c.bf16 %v46, %v46
  %v75 = vpack.c.bf16 %v45, %v45
  %v76 = vpack.c.bf16 %v47, %v47
  %v77 = vpack.c.bf16 %v55, %v55
  %v78 = vpack.c.bf16 %v63, %v63
  %v79 = vpack.c.bf16 %v62, %v62
  %v80 = vpack.c.bf16 %v64, %v64
  %v81 = vld [vmem:[%s1] sm:$0xf]
  %v82 = vld [vmem:[%s1 + $0x4] sm:$0xf]
  %v83 = vld [vmem:[%s1 + $0x8] sm:$0xf]
  %v84 = vld [vmem:[%s1 + $0xc] sm:$0xf]
  %v85 = vld [vmem:[%s1 + $0x10] sm:$0xf]
  %v86 = vld [vmem:[%s1 + $0x14] sm:$0xf]
  %v87 = vld [vmem:[%s1 + $0x18] sm:$0xf]
  %v88 = vld [vmem:[%s1 + $0x1c] sm:$0xf]
  %v89 = vld [vmem:[%s1 + $0x20] sm:$0xf]
  %v90 = vld [vmem:[%s1 + $0x24] sm:$0xf]
  %v91 = vld [vmem:[%s1 + $0x28] sm:$0xf]
  %v92 = vld [vmem:[%s1 + $0x2c] sm:$0xf]
  %v93 = vld [vmem:[%s1 + $0x30] sm:$0xf]
  %v94 = vld [vmem:[%s1 + $0x34] sm:$0xf]
  %v95 = vld [vmem:[%s1 + $0x38] sm:$0xf]
  %v96 = vld [vmem:[%s1 + $0x3c] sm:$0xf]
  %v97 = vld [vmem:[%s1 + $0x40] sm:$0xf]
  %v98 = vld [vmem:[%s1 + $0x44] sm:$0xf]
  %v99 = vld [vmem:[%s1 + $0x48] sm:$0xf]
  %v100 = vld [vmem:[%s1 + $0x4c] sm:$0xf]
  %v101 = vld [vmem:[%s1 + $0x50] sm:$0xf]
  %v102 = vld [vmem:[%s1 + $0x54] sm:$0xf]
  %v103 = vld [vmem:[%s1 + $0x58] sm:$0xf]
  %v104 = vld [vmem:[%s1 + $0x5c] sm:$0xf]
  %v105 = vld [vmem:[%s1 + $0x60] sm:$0xf]
  %v106 = vld [vmem:[%s1 + $0x64] sm:$0xf]
  %v107 = vld [vmem:[%s1 + $0x68] sm:$0xf]
  %v108 = vld [vmem:[%s1 + $0x6c] sm:$0xf]
  %v109 = vld [vmem:[%s1 + $0x70] sm:$0xf]
  %v110 = vld [vmem:[%s1 + $0x74] sm:$0xf]
  %v111 = vld [vmem:[%s1 + $0x78] sm:$0xf]
  %v112 = vld [vmem:[%s1 + $0x7c] sm:$0xf]
  %v113 = vld [vmem:[%s1 + $0x80] sm:$0xf]
  %v114 = vld [vmem:[%s1 + $0x84] sm:$0xf]
  %v115 = vld [vmem:[%s1 + $0x88] sm:$0xf]
  %v116 = vld [vmem:[%s1 + $0x8c] sm:$0xf]
  %v117 = vld [vmem:[%s1 + $0x90] sm:$0xf]
  %v118 = vld [vmem:[%s1 + $0x94] sm:$0xf]
  %v119 = vld [vmem:[%s1 + $0x98] sm:$0xf]
  %v120 = vld [vmem:[%s1 + $0x9c] sm:$0xf]
  %v121 = vld [vmem:[%s1 + $0xa0] sm:$0xf]
  %v122 = vld [vmem:[%s1 + $0xa4] sm:$0xf]
  %v123 = vld [vmem:[%s1 + $0xa8] sm:$0xf]
  %v124 = vld [vmem:[%s1 + $0xac] sm:$0xf]
  %v125 = vld [vmem:[%s1 + $0xb0] sm:$0xf]
  %v126 = vld [vmem:[%s1 + $0xb4] sm:$0xf]
  %v127 = vld [vmem:[%s1 + $0xb8] sm:$0xf]
  %v128 = vld [vmem:[%s1 + $0xbc] sm:$0xf]
  %v129 = vld [vmem:[%s1 + $0xc0] sm:$0xf]
  %v130 = vld [vmem:[%s1 + $0xc4] sm:$0xf]
  %v131 = vld [vmem:[%s1 + $0xc8] sm:$0xf]
  %v132 = vld [vmem:[%s1 + $0xcc] sm:$0xf]
  %v133 = vld [vmem:[%s1 + $0xd0] sm:$0xf]
  %v134 = vld [vmem:[%s1 + $0xd4] sm:$0xf]
  %v135 = vld [vmem:[%s1 + $0xd8] sm:$0xf]
  %v136 = vld [vmem:[%s1 + $0xdc] sm:$0xf]
  %v137 = vld [vmem:[%s1 + $0xe0] sm:$0xf]
  %v138 = vld [vmem:[%s1 + $0xe4] sm:$0xf]
  %v139 = vld [vmem:[%s1 + $0xe8] sm:$0xf]
  %v140 = vld [vmem:[%s1 + $0xec] sm:$0xf]
  %v141 = vld [vmem:[%s1 + $0xf0] sm:$0xf]
  %v142 = vld [vmem:[%s1 + $0xf4] sm:$0xf]
  %v143 = vld [vmem:[%s1 + $0xf8] sm:$0xf]
  %v144 = vld [vmem:[%s1 + $0xfc] sm:$0xf]
  %v145 = vld [vmem:[%s1 + $0x100] sm:$0xf]
  %v146 = vld [vmem:[%s1 + $0x104] sm:$0xf]
  %v147 = vld [vmem:[%s1 + $0x108] sm:$0xf]
  %v148 = vld [vmem:[%s1 + $0x10c] sm:$0xf]
  %v149 = vld [vmem:[%s1 + $0x110] sm:$0xf]
  %v150 = vld [vmem:[%s1 + $0x114] sm:$0xf]
  %v151 = vld [vmem:[%s1 + $0x118] sm:$0xf]
  %v152 = vld [vmem:[%s1 + $0x11c] sm:$0xf]
  %v153 = vld [vmem:[%s1 + $0x120] sm:$0xf]
  %v154 = vld [vmem:[%s1 + $0x124] sm:$0xf]
  %v155 = vld [vmem:[%s1 + $0x128] sm:$0xf]
  %v156 = vld [vmem:[%s1 + $0x12c] sm:$0xf]
  %v157 = vld [vmem:[%s1 + $0x130] sm:$0xf]
  %v158 = vld [vmem:[%s1 + $0x134] sm:$0xf]
  %v159 = vld [vmem:[%s1 + $0x138] sm:$0xf]
  %v160 = vld [vmem:[%s1 + $0x13c] sm:$0xf]
  %v161 = vld [vmem:[%s1 + $0x140] sm:$0xf]
  %v162 = vld [vmem:[%s1 + $0x144] sm:$0xf]
  %v163 = vld [vmem:[%s1 + $0x148] sm:$0xf]
  %v164 = vld [vmem:[%s1 + $0x14c] sm:$0xf]
  %v165 = vld [vmem:[%s1 + $0x150] sm:$0xf]
  %v166 = vld [vmem:[%s1 + $0x154] sm:$0xf]
  %v167 = vld [vmem:[%s1 + $0x158] sm:$0xf]
  %v168 = vld [vmem:[%s1 + $0x15c] sm:$0xf]
  %v169 = vld [vmem:[%s1 + $0x160] sm:$0xf]
  %v170 = vld [vmem:[%s1 + $0x164] sm:$0xf]
  %v171 = vld [vmem:[%s1 + $0x168] sm:$0xf]
  %v172 = vld [vmem:[%s1 + $0x16c] sm:$0xf]
  %v173 = vld [vmem:[%s1 + $0x170] sm:$0xf]
  %v174 = vld [vmem:[%s1 + $0x174] sm:$0xf]
  %v175 = vld [vmem:[%s1 + $0x178] sm:$0xf]
  %v176 = vld [vmem:[%s1 + $0x17c] sm:$0xf]
  %v177 = vld [vmem:[%s1 + $0x180] sm:$0xf]
  %v178 = vld [vmem:[%s1 + $0x184] sm:$0xf]
  %v179 = vld [vmem:[%s1 + $0x188] sm:$0xf]
  %v180 = vld [vmem:[%s1 + $0x18c] sm:$0xf]
  %v181 = vld [vmem:[%s1 + $0x190] sm:$0xf]
  %v182 = vld [vmem:[%s1 + $0x194] sm:$0xf]
  %v183 = vld [vmem:[%s1 + $0x198] sm:$0xf]
  %v184 = vld [vmem:[%s1 + $0x19c] sm:$0xf]
  %v185 = vld [vmem:[%s1 + $0x1a0] sm:$0xf]
  %v186 = vld [vmem:[%s1 + $0x1a4] sm:$0xf]
  %v187 = vld [vmem:[%s1 + $0x1a8] sm:$0xf]
  %v188 = vld [vmem:[%s1 + $0x1ac] sm:$0xf]
  %v189 = vld [vmem:[%s1 + $0x1b0] sm:$0xf]
  %v190 = vld [vmem:[%s1 + $0x1b4] sm:$0xf]
  %v191 = vld [vmem:[%s1 + $0x1b8] sm:$0xf]
  %v192 = vld [vmem:[%s1 + $0x1bc] sm:$0xf]
  %v193 = vld [vmem:[%s1 + $0x1c0] sm:$0xf]
  %v194 = vld [vmem:[%s1 + $0x1c4] sm:$0xf]
  %v195 = vld [vmem:[%s1 + $0x1c8] sm:$0xf]
  %v196 = vld [vmem:[%s1 + $0x1cc] sm:$0xf]
  %v197 = vld [vmem:[%s1 + $0x1d0] sm:$0xf]
  %v198 = vld [vmem:[%s1 + $0x1d4] sm:$0xf]
  %v199 = vld [vmem:[%s1 + $0x1d8] sm:$0xf]
  %v200 = vld [vmem:[%s1 + $0x1dc] sm:$0xf]
  %v201 = vld [vmem:[%s1 + $0x1e0] sm:$0xf]
  %v202 = vld [vmem:[%s1 + $0x1e4] sm:$0xf]
  %v203 = vld [vmem:[%s1 + $0x1e8] sm:$0xf]
  %v204 = vld [vmem:[%s1 + $0x1ec] sm:$0xf]
  %v205 = vld [vmem:[%s1 + $0x1f0] sm:$0xf]
  %v206 = vld [vmem:[%s1 + $0x1f4] sm:$0xf]
  %v207 = vld [vmem:[%s1 + $0x1f8] sm:$0xf]
  %v208 = vld [vmem:[%s1 + $0x1fc] sm:$0xf]
  %v209 = vld [vmem:[%s2] sm:$0x1]
  %v211 = vlaneseq
  %v212 = vshrl.u32 %v211, 7
  %v213 = vsub.s32 0, %v212
  %v214 = vrot.slane %v209, %v213
  %v344 = vunpack.c.l.b16 %v81
  %v345 = vunpack.c.l.b16 %v82
  %v346 = vunpack.c.l.b16 %v83
  %v347 = vunpack.c.l.b16 %v84
  %v348 = vunpack.c.l.b16 %v85
  %v349 = vunpack.c.l.b16 %v86
  %v350 = vunpack.c.l.b16 %v87
  %v351 = vunpack.c.l.b16 %v88
  %v352 = vunpack.c.l.b16 %v89
  %v353 = vunpack.c.l.b16 %v90
  %v354 = vunpack.c.l.b16 %v91
  %v355 = vunpack.c.l.b16 %v92
  %v356 = vunpack.c.l.b16 %v93
  %v357 = vunpack.c.l.b16 %v94
  %v358 = vunpack.c.l.b16 %v95
  %v359 = vunpack.c.l.b16 %v96
  %v360 = vunpack.c.l.b16 %v97
  %v361 = vunpack.c.l.b16 %v98
  %v362 = vunpack.c.l.b16 %v99
  %v363 = vunpack.c.l.b16 %v100
  %v364 = vunpack.c.l.b16 %v101
  %v365 = vunpack.c.l.b16 %v102
  %v366 = vunpack.c.l.b16 %v103
  %v367 = vunpack.c.l.b16 %v104
  %v368 = vunpack.c.l.b16 %v105
  %v369 = vunpack.c.l.b16 %v106
  %v370 = vunpack.c.l.b16 %v107
  %v371 = vunpack.c.l.b16 %v108
  %v372 = vunpack.c.l.b16 %v109
  %v373 = vunpack.c.l.b16 %v110
  %v374 = vunpack.c.l.b16 %v111
  %v375 = vunpack.c.l.b16 %v112
  %v376 = vunpack.c.l.b16 %v113
  %v377 = vunpack.c.l.b16 %v114
  %v378 = vunpack.c.l.b16 %v115
  %v379 = vunpack.c.l.b16 %v116
  %v380 = vunpack.c.l.b16 %v117
  %v381 = vunpack.c.l.b16 %v118
  %v382 = vunpack.c.l.b16 %v119
  %v383 = vunpack.c.l.b16 %v120
  %v384 = vunpack.c.l.b16 %v121
  %v385 = vunpack.c.l.b16 %v122
  %v386 = vunpack.c.l.b16 %v123
  %v387 = vunpack.c.l.b16 %v124
  %v388 = vunpack.c.l.b16 %v125
  %v389 = vunpack.c.l.b16 %v126
  %v390 = vunpack.c.l.b16 %v127
  %v391 = vunpack.c.l.b16 %v128
  %v392 = vunpack.c.l.b16 %v129
  %v393 = vunpack.c.l.b16 %v130
  %v394 = vunpack.c.l.b16 %v131
  %v395 = vunpack.c.l.b16 %v132
  %v396 = vunpack.c.l.b16 %v133
  %v397 = vunpack.c.l.b16 %v134
  %v398 = vunpack.c.l.b16 %v135
  %v399 = vunpack.c.l.b16 %v136
  %v400 = vunpack.c.l.b16 %v137
  %v401 = vunpack.c.l.b16 %v138
  %v402 = vunpack.c.l.b16 %v139
  %v403 = vunpack.c.l.b16 %v140
  %v404 = vunpack.c.l.b16 %v141
  %v405 = vunpack.c.l.b16 %v142
  %v406 = vunpack.c.l.b16 %v143
  %v407 = vunpack.c.l.b16 %v144
  %v408 = vunpack.c.l.b16 %v145
  %v409 = vunpack.c.l.b16 %v146
  %v410 = vunpack.c.l.b16 %v147
  %v411 = vunpack.c.l.b16 %v148
  %v412 = vunpack.c.l.b16 %v149
  %v413 = vunpack.c.l.b16 %v150
  %v414 = vunpack.c.l.b16 %v151
  %v415 = vunpack.c.l.b16 %v152
  %v416 = vunpack.c.l.b16 %v153
  %v417 = vunpack.c.l.b16 %v154
  %v418 = vunpack.c.l.b16 %v155
  %v419 = vunpack.c.l.b16 %v156
  %v420 = vunpack.c.l.b16 %v157
  %v421 = vunpack.c.l.b16 %v158
  %v422 = vunpack.c.l.b16 %v159
  %v423 = vunpack.c.l.b16 %v160
  %v424 = vunpack.c.l.b16 %v161
  %v425 = vunpack.c.l.b16 %v162
  %v426 = vunpack.c.l.b16 %v163
  %v427 = vunpack.c.l.b16 %v164
  %v428 = vunpack.c.l.b16 %v165
  %v429 = vunpack.c.l.b16 %v166
  %v430 = vunpack.c.l.b16 %v167
  %v431 = vunpack.c.l.b16 %v168
  %v432 = vunpack.c.l.b16 %v169
  %v433 = vunpack.c.l.b16 %v170
  %v434 = vunpack.c.l.b16 %v171
  %v435 = vunpack.c.l.b16 %v172
  %v436 = vunpack.c.l.b16 %v173
  %v437 = vunpack.c.l.b16 %v174
  %v438 = vunpack.c.l.b16 %v175
  %v439 = vunpack.c.l.b16 %v176
  %v440 = vunpack.c.l.b16 %v177
  %v441 = vunpack.c.l.b16 %v178
  %v442 = vunpack.c.l.b16 %v179
  %v443 = vunpack.c.l.b16 %v180
  %v444 = vunpack.c.l.b16 %v181
  %v445 = vunpack.c.l.b16 %v182
  %v446 = vunpack.c.l.b16 %v183
  %v447 = vunpack.c.l.b16 %v184
  %v448 = vunpack.c.l.b16 %v185
  %v449 = vunpack.c.l.b16 %v186
  %v450 = vunpack.c.l.b16 %v187
  %v451 = vunpack.c.l.b16 %v188
  %v452 = vunpack.c.l.b16 %v189
  %v453 = vunpack.c.l.b16 %v190
  %v454 = vunpack.c.l.b16 %v191
  %v455 = vunpack.c.l.b16 %v192
  %v456 = vunpack.c.l.b16 %v193
  %v457 = vunpack.c.l.b16 %v194
  %v458 = vunpack.c.l.b16 %v195
  %v459 = vunpack.c.l.b16 %v196
  %v460 = vunpack.c.l.b16 %v197
  %v461 = vunpack.c.l.b16 %v198
  %v462 = vunpack.c.l.b16 %v199
  %v463 = vunpack.c.l.b16 %v200
  %v464 = vunpack.c.l.b16 %v201
  %v465 = vunpack.c.l.b16 %v202
  %v466 = vunpack.c.l.b16 %v203
  %v467 = vunpack.c.l.b16 %v204
  %v468 = vunpack.c.l.b16 %v205
  %v469 = vunpack.c.l.b16 %v206
  %v470 = vunpack.c.l.b16 %v207
  %v471 = vunpack.c.l.b16 %v208
  %v472 = vpack.c.b16 %v345, %v344
  %v473 = vpack.c.b16 %v347, %v346
  %v474 = vpack.c.b16 %v349, %v348
  %v475 = vpack.c.b16 %v351, %v350
  %v476 = vpack.c.b16 %v353, %v352
  %v477 = vpack.c.b16 %v355, %v354
  %v478 = vpack.c.b16 %v357, %v356
  %v479 = vpack.c.b16 %v359, %v358
  %v480 = vpack.c.b16 %v361, %v360
  %v481 = vpack.c.b16 %v363, %v362
  %v482 = vpack.c.b16 %v365, %v364
  %v483 = vpack.c.b16 %v367, %v366
  %v484 = vpack.c.b16 %v369, %v368
  %v485 = vpack.c.b16 %v371, %v370
  %v486 = vpack.c.b16 %v373, %v372
  %v487 = vpack.c.b16 %v375, %v374
  %v488 = vpack.c.b16 %v377, %v376
  %v489 = vpack.c.b16 %v379, %v378
  %v490 = vpack.c.b16 %v381, %v380
  %v491 = vpack.c.b16 %v383, %v382
  %v492 = vpack.c.b16 %v385, %v384
  %v493 = vpack.c.b16 %v387, %v386
  %v494 = vpack.c.b16 %v389, %v388
  %v495 = vpack.c.b16 %v391, %v390
  %v496 = vpack.c.b16 %v393, %v392
  %v497 = vpack.c.b16 %v395, %v394
  %v498 = vpack.c.b16 %v397, %v396
  %v499 = vpack.c.b16 %v399, %v398
  %v500 = vpack.c.b16 %v401, %v400
  %v501 = vpack.c.b16 %v403, %v402
  %v502 = vpack.c.b16 %v405, %v404
  %v503 = vpack.c.b16 %v407, %v406
  %v504 = vpack.c.b16 %v409, %v408
  %v505 = vpack.c.b16 %v411, %v410
  %v506 = vpack.c.b16 %v413, %v412
  %v507 = vpack.c.b16 %v415, %v414
  %v508 = vpack.c.b16 %v417, %v416
  %v509 = vpack.c.b16 %v419, %v418
  %v510 = vpack.c.b16 %v421, %v420
  %v511 = vpack.c.b16 %v423, %v422
  %v512 = vpack.c.b16 %v425, %v424
  %v513 = vpack.c.b16 %v427, %v426
  %v514 = vpack.c.b16 %v429, %v428
  %v515 = vpack.c.b16 %v431, %v430
  %v516 = vpack.c.b16 %v433, %v432
  %v517 = vpack.c.b16 %v435, %v434
  %v518 = vpack.c.b16 %v437, %v436
  %v519 = vpack.c.b16 %v439, %v438
  %v520 = vpack.c.b16 %v441, %v440
  %v521 = vpack.c.b16 %v443, %v442
  %v522 = vpack.c.b16 %v445, %v444
  %v523 = vpack.c.b16 %v447, %v446
  %v524 = vpack.c.b16 %v449, %v448
  %v525 = vpack.c.b16 %v451, %v450
  %v526 = vpack.c.b16 %v453, %v452
  %v527 = vpack.c.b16 %v455, %v454
  %v528 = vpack.c.b16 %v457, %v456
  %v529 = vpack.c.b16 %v459, %v458
  %v530 = vpack.c.b16 %v461, %v460
  %v531 = vpack.c.b16 %v463, %v462
  %v532 = vpack.c.b16 %v465, %v464
  %v533 = vpack.c.b16 %v467, %v466
  %v534 = vpack.c.b16 %v469, %v468
  %v535 = vpack.c.b16 %v471, %v470
  %600 = vmatprep.subr.bf16.mxu0 0
  %601 = vmatpush1.bf16.msra.mxu0 %v472
  %602 = vmatprep.subr.bf16.mxu0 0
  %603 = vmatpush1.bf16.msra.mxu0 %v473
  %604 = vmatprep.subr.bf16.mxu0 0
  %605 = vmatpush1.bf16.msra.mxu0 %v474
  %606 = vmatprep.subr.bf16.mxu0 0
  %607 = vmatpush1.bf16.msra.mxu0 %v475
  %608 = vmatprep.subr.bf16.mxu0 0
  %609 = vmatpush1.bf16.msra.mxu0 %v476
  %610 = vmatprep.subr.bf16.mxu0 0
  %611 = vmatpush1.bf16.msra.mxu0 %v477
  %612 = vmatprep.subr.bf16.mxu0 0
  %613 = vmatpush1.bf16.msra.mxu0 %v478
  %614 = vmatprep.subr.bf16.mxu0 0
  %615 = vmatpush1.bf16.msra.mxu0 %v479
  %616 = vmatprep.subr.bf16.mxu0 0
  %617 = vmatpush1.bf16.msra.mxu0 %v480
  %618 = vmatprep.subr.bf16.mxu0 0
  %619 = vmatpush1.bf16.msra.mxu0 %v481
  %620 = vmatprep.subr.bf16.mxu0 0
  %621 = vmatpush1.bf16.msra.mxu0 %v482
  %622 = vmatprep.subr.bf16.mxu0 0
  %623 = vmatpush1.bf16.msra.mxu0 %v483
  %624 = vmatprep.subr.bf16.mxu0 0
  %625 = vmatpush1.bf16.msra.mxu0 %v484
  %626 = vmatprep.subr.bf16.mxu0 0
  %627 = vmatpush1.bf16.msra.mxu0 %v485
  %628 = vmatprep.subr.bf16.mxu0 0
  %629 = vmatpush1.bf16.msra.mxu0 %v486
  %630 = vmatprep.subr.bf16.mxu0 0
  %631 = vmatpush1.bf16.msra.mxu0 %v487
  %632 = vmatprep.mubr.bf16.mxu0 %v74
  %633 = vmatmul.mubr.bf16.gmra.mrb[0].mxu0 %v73
  %v634 = vpop.f32.mrb[0].mxu0
  %v635 = vadd.f32 %v214, %v634
  %v636 = vpop.f32.mrb[0].mxu0
  %v637 = vpop.f32.mrb[0].mxu0
  %v638 = vpop.f32.mrb[0].mxu0
  %639 = vdwg.mxu0
  %640 = vmatprep.subr.bf16.mxu0 0
  %641 = vmatpush1.bf16.msra.mxu0 %v488
  %642 = vmatprep.subr.bf16.mxu0 0
  %643 = vmatpush1.bf16.msra.mxu0 %v489
  %644 = vmatprep.subr.bf16.mxu0 0
  %645 = vmatpush1.bf16.msra.mxu0 %v490
  %646 = vmatprep.subr.bf16.mxu0 0
  %647 = vmatpush1.bf16.msra.mxu0 %v491
  %648 = vmatprep.subr.bf16.mxu0 0
  %649 = vmatpush1.bf16.msra.mxu0 %v492
  %650 = vmatprep.subr.bf16.mxu0 0
  %651 = vmatpush1.bf16.msra.mxu0 %v493
  %652 = vmatprep.subr.bf16.mxu0 0
  %653 = vmatpush1.bf16.msra.mxu0 %v494
  %654 = vmatprep.subr.bf16.mxu0 0
  %655 = vmatpush1.bf16.msra.mxu0 %v495
  %656 = vmatprep.subr.bf16.mxu0 0
  %657 = vmatpush1.bf16.msra.mxu0 %v496
  %658 = vmatprep.subr.bf16.mxu0 0
  %659 = vmatpush1.bf16.msra.mxu0 %v497
  %660 = vmatprep.subr.bf16.mxu0 0
  %661 = vmatpush1.bf16.msra.mxu0 %v498
  %662 = vmatprep.subr.bf16.mxu0 0
  %663 = vmatpush1.bf16.msra.mxu0 %v499
  %664 = vmatprep.subr.bf16.mxu0 0
  %665 = vmatpush1.bf16.msra.mxu0 %v500
  %666 = vmatprep.subr.bf16.mxu0 0
  %667 = vmatpush1.bf16.msra.mxu0 %v501
  %668 = vmatprep.subr.bf16.mxu0 0
  %669 = vmatpush1.bf16.msra.mxu0 %v502
  %670 = vmatprep.subr.bf16.mxu0 0
  %671 = vmatpush1.bf16.msra.mxu0 %v503
  %672 = vmatprep.mubr.bf16.mxu0 %v76
  %673 = vmatmul.mubr.bf16.gmra.mrb[0].mxu0 %v75
  %v674 = vpop.f32.mrb[0].mxu0
  %v675 = vadd.f32 %v635, %v674
  %v676 = vpop.f32.mrb[0].mxu0
  %v677 = vpop.f32.mrb[0].mxu0
  %v678 = vpop.f32.mrb[0].mxu0
  %679 = vdwg.mxu0
  %680 = vmatprep.subr.bf16.mxu0 0
  %681 = vmatpush1.bf16.msra.mxu0 %v504
  %682 = vmatprep.subr.bf16.mxu0 0
  %683 = vmatpush1.bf16.msra.mxu0 %v505
  %684 = vmatprep.subr.bf16.mxu0 0
  %685 = vmatpush1.bf16.msra.mxu0 %v506
  %686 = vmatprep.subr.bf16.mxu0 0
  %687 = vmatpush1.bf16.msra.mxu0 %v507
  %688 = vmatprep.subr.bf16.mxu0 0
  %689 = vmatpush1.bf16.msra.mxu0 %v508
  %690 = vmatprep.subr.bf16.mxu0 0
  %691 = vmatpush1.bf16.msra.mxu0 %v509
  %692 = vmatprep.subr.bf16.mxu0 0
  %693 = vmatpush1.bf16.msra.mxu0 %v510
  %694 = vmatprep.subr.bf16.mxu0 0
  %695 = vmatpush1.bf16.msra.mxu0 %v511
  %696 = vmatprep.subr.bf16.mxu0 0
  %697 = vmatpush1.bf16.msra.mxu0 %v512
  %698 = vmatprep.subr.bf16.mxu0 0
  %699 = vmatpush1.bf16.msra.mxu0 %v513
  %700 = vmatprep.subr.bf16.mxu0 0
  %701 = vmatpush1.bf16.msra.mxu0 %v514
  %702 = vmatprep.subr.bf16.mxu0 0
  %703 = vmatpush1.bf16.msra.mxu0 %v515
  %704 = vmatprep.subr.bf16.mxu0 0
  %705 = vmatpush1.bf16.msra.mxu0 %v516
  %706 = vmatprep.subr.bf16.mxu0 0
  %707 = vmatpush1.bf16.msra.mxu0 %v517
  %708 = vmatprep.subr.bf16.mxu0 0
  %709 = vmatpush1.bf16.msra.mxu0 %v518
  %710 = vmatprep.subr.bf16.mxu0 0
  %711 = vmatpush1.bf16.msra.mxu0 %v519
  %712 = vmatprep.mubr.bf16.mxu0 %v78
  %713 = vmatmul.mubr.bf16.gmra.mrb[0].mxu0 %v77
  %v714 = vpop.f32.mrb[0].mxu0
  %v715 = vadd.f32 %v675, %v714
  %v716 = vpop.f32.mrb[0].mxu0
  %v717 = vpop.f32.mrb[0].mxu0
  %v718 = vpop.f32.mrb[0].mxu0
  %719 = vdwg.mxu0
  %720 = vmatprep.subr.bf16.mxu0 0
  %721 = vmatpush1.bf16.msra.mxu0 %v520
  %722 = vmatprep.subr.bf16.mxu0 0
  %723 = vmatpush1.bf16.msra.mxu0 %v521
  %724 = vmatprep.subr.bf16.mxu0 0
  %725 = vmatpush1.bf16.msra.mxu0 %v522
  %726 = vmatprep.subr.bf16.mxu0 0
  %727 = vmatpush1.bf16.msra.mxu0 %v523
  %728 = vmatprep.subr.bf16.mxu0 0
  %729 = vmatpush1.bf16.msra.mxu0 %v524
  %730 = vmatprep.subr.bf16.mxu0 0
  %731 = vmatpush1.bf16.msra.mxu0 %v525
  %732 = vmatprep.subr.bf16.mxu0 0
  %733 = vmatpush1.bf16.msra.mxu0 %v526
  %734 = vmatprep.subr.bf16.mxu0 0
  %735 = vmatpush1.bf16.msra.mxu0 %v527
  %736 = vmatprep.subr.bf16.mxu0 0
  %737 = vmatpush1.bf16.msra.mxu0 %v528
  %738 = vmatprep.subr.bf16.mxu0 0
  %739 = vmatpush1.bf16.msra.mxu0 %v529
  %740 = vmatprep.subr.bf16.mxu0 0
  %741 = vmatpush1.bf16.msra.mxu0 %v530
  %742 = vmatprep.subr.bf16.mxu0 0
  %743 = vmatpush1.bf16.msra.mxu0 %v531
  %744 = vmatprep.subr.bf16.mxu0 0
  %745 = vmatpush1.bf16.msra.mxu0 %v532
  %746 = vmatprep.subr.bf16.mxu0 0
  %747 = vmatpush1.bf16.msra.mxu0 %v533
  %748 = vmatprep.subr.bf16.mxu0 0
  %749 = vmatpush1.bf16.msra.mxu0 %v534
  %750 = vmatprep.subr.bf16.mxu0 0
  %751 = vmatpush1.bf16.msra.mxu0 %v535
  %752 = vmatprep.mubr.bf16.mxu0 %v80
  %753 = vmatmul.mubr.bf16.gmra.mrb[0].mxu0 %v79
  %v754 = vpop.f32.mrb[0].mxu0
  %v755 = vadd.f32 %v715, %v754
  %v756 = vpop.f32.mrb[0].mxu0
  %v757 = vpop.f32.mrb[0].mxu0
  %v758 = vpop.f32.mrb[0].mxu0
  %759 = vdwg.mxu0
  %v760 = vmax.f32 %v755, 0.0
  %v761 = vld [vmem:[%s3] sm:$0xff]
  %v762 = vld [vmem:[%s3 + $0x8] sm:$0xff]
  %v763 = vld [vmem:[%s4] sm:$0x1]
  %v765 = vlaneseq
  %v766 = vshrl.u32 %v765, 7
  %v767 = vsub.s32 0, %v766
  %v768 = vrot.slane %v763, %v767
  %vm770 = vcmask 130048
  %v772 = vsel %vm770, %v760, 0
  %774 = vmatprep.subr.mxu0 0.0
  %775 = vmatpush1.msra.mxu0 %v761
  %776 = vmatprep.subr.mxu0 0.0
  %777 = vmatpush1.msra.mxu0 %v762
  %778 = vmatprep.subr.mxu0 0.0
  %779 = vmatpush1.msra.mxu0 0.0
  %780 = vmatprep.subr.mxu0 0.0
  %781 = vmatpush1.msra.mxu0 0.0
  %782 = vmatprep.subr.mxu0 0.0
  %783 = vmatpush1.msra.mxu0 0.0
  %784 = vmatprep.subr.mxu0 0.0
  %785 = vmatpush1.msra.mxu0 0.0
  %786 = vmatprep.subr.mxu0 0.0
  %787 = vmatpush1.msra.mxu0 0.0
  %788 = vmatprep.subr.mxu0 0.0
  %789 = vmatpush1.msra.mxu0 0.0
  %790 = vmatprep.subr.mxu0 0.0
  %791 = vmatpush1.msra.mxu0 0.0
  %792 = vmatprep.subr.mxu0 0.0
  %793 = vmatpush1.msra.mxu0 0.0
  %794 = vmatprep.subr.mxu0 0.0
  %795 = vmatpush1.msra.mxu0 0.0
  %796 = vmatprep.subr.mxu0 0.0
  %797 = vmatpush1.msra.mxu0 0.0
  %798 = vmatprep.subr.mxu0 0.0
  %799 = vmatpush1.msra.mxu0 0.0
  %800 = vmatprep.subr.mxu0 0.0
  %801 = vmatpush1.msra.mxu0 0.0
  %802 = vmatprep.subr.mxu0 0.0
  %803 = vmatpush1.msra.mxu0 0.0
  %804 = vmatprep.subr.mxu0 0.0
  %805 = vmatpush1.msra.mxu0 0.0
  %806 = vmatprep.subr.mxu0 0.0
  %807 = vmatpush1.msra.mxu0 0.0
  %808 = vmatprep.subr.mxu0 0.0
  %809 = vmatpush1.msra.mxu0 0.0
  %810 = vmatprep.subr.mxu0 0.0
  %811 = vmatpush1.msra.mxu0 0.0
  %812 = vmatprep.subr.mxu0 0.0
  %813 = vmatpush1.msra.mxu0 0.0
  %814 = vmatprep.subr.mxu0 0.0
  %815 = vmatpush1.msra.mxu0 0.0
  %816 = vmatprep.subr.mxu0 0.0
  %817 = vmatpush1.msra.mxu0 0.0
  %818 = vmatprep.subr.mxu0 0.0
  %819 = vmatpush1.msra.mxu0 0.0
  %820 = vmatprep.subr.mxu0 0.0
  %821 = vmatpush1.msra.mxu0 0.0
  %822 = vmatprep.subr.mxu0 0.0
  %823 = vmatpush1.msra.mxu0 0.0
  %824 = vmatprep.subr.mxu0 0.0
  %825 = vmatpush1.msra.mxu0 0.0
  %826 = vmatprep.subr.mxu0 0.0
  %827 = vmatpush1.msra.mxu0 0.0
  %828 = vmatprep.subr.mxu0 0.0
  %829 = vmatpush1.msra.mxu0 0.0
  %830 = vmatprep.subr.mxu0 0.0
  %831 = vmatpush1.msra.mxu0 0.0
  %832 = vmatprep.subr.mxu0 0.0
  %833 = vmatpush1.msra.mxu0 0.0
  %834 = vmatprep.subr.mxu0 0.0
  %835 = vmatpush1.msra.mxu0 0.0
  %836 = vmatprep.subr.mxu0 0.0
  %837 = vmatpush1.msra.mxu0 0.0
  %838 = vmatprep.mubr.f32.mxu0 0.0
  %839 = vmatmul.mubr.f32.gmra.mrb[0].mxu0 %v772
  %v840 = vpop.f32.mrb[0].mxu0
  %v841 = vadd.f32 %v768, %v840
  %v842 = vpop.f32.mrb[0].mxu0
  %843 = vdwg.mxu0
  %v844 = vmax.f32 %v841, 0.0
  %v845 = vld [vmem:[%s5] sm:$0xff]
  %v846 = vld [vmem:[%s5 + $0x8] sm:$0xff]
  %v847 = vld [vmem:[%s5 + $0x10] sm:$0xff]
  %v848 = vld [vmem:[%s5 + $0x18] sm:$0xff]
  %v849 = vld [vmem:[%s6] sm:$0x1]
  %v851 = vlaneseq
  %v852 = vshrl.u32 %v851, 7
  %v853 = vsub.s32 0, %v852
  %v854 = vrot.slane %v849, %v853
  %vm856 = vcmask 261120
  %v858 = vsel %vm856, %v844, 0
  %860 = vmatprep.subr.mxu0 0.0
  %861 = vmatpush1.msra.mxu0 %v845
  %862 = vmatprep.subr.mxu0 0.0
  %863 = vmatpush1.msra.mxu0 %v846
  %864 = vmatprep.subr.mxu0 0.0
  %865 = vmatpush1.msra.mxu0 %v847
  %866 = vmatprep.subr.mxu0 0.0
  %867 = vmatpush1.msra.mxu0 %v848
  %868 = vmatprep.subr.mxu0 0.0
  %869 = vmatpush1.msra.mxu0 0.0
  %870 = vmatprep.subr.mxu0 0.0
  %871 = vmatpush1.msra.mxu0 0.0
  %872 = vmatprep.subr.mxu0 0.0
  %873 = vmatpush1.msra.mxu0 0.0
  %874 = vmatprep.subr.mxu0 0.0
  %875 = vmatpush1.msra.mxu0 0.0
  %876 = vmatprep.subr.mxu0 0.0
  %877 = vmatpush1.msra.mxu0 0.0
  %878 = vmatprep.subr.mxu0 0.0
  %879 = vmatpush1.msra.mxu0 0.0
  %880 = vmatprep.subr.mxu0 0.0
  %881 = vmatpush1.msra.mxu0 0.0
  %882 = vmatprep.subr.mxu0 0.0
  %883 = vmatpush1.msra.mxu0 0.0
  %884 = vmatprep.subr.mxu0 0.0
  %885 = vmatpush1.msra.mxu0 0.0
  %886 = vmatprep.subr.mxu0 0.0
  %887 = vmatpush1.msra.mxu0 0.0
  %888 = vmatprep.subr.mxu0 0.0
  %889 = vmatpush1.msra.mxu0 0.0
  %890 = vmatprep.subr.mxu0 0.0
  %891 = vmatpush1.msra.mxu0 0.0
  %892 = vmatprep.subr.mxu0 0.0
  %893 = vmatpush1.msra.mxu0 0.0
  %894 = vmatprep.subr.mxu0 0.0
  %895 = vmatpush1.msra.mxu0 0.0
  %896 = vmatprep.subr.mxu0 0.0
  %897 = vmatpush1.msra.mxu0 0.0
  %898 = vmatprep.subr.mxu0 0.0
  %899 = vmatpush1.msra.mxu0 0.0
  %900 = vmatprep.subr.mxu0 0.0
  %901 = vmatpush1.msra.mxu0 0.0
  %902 = vmatprep.subr.mxu0 0.0
  %903 = vmatpush1.msra.mxu0 0.0
  %904 = vmatprep.subr.mxu0 0.0
  %905 = vmatpush1.msra.mxu0 0.0
  %906 = vmatprep.subr.mxu0 0.0
  %907 = vmatpush1.msra.mxu0 0.0
  %908 = vmatprep.subr.mxu0 0.0
  %909 = vmatpush1.msra.mxu0 0.0
  %910 = vmatprep.subr.mxu0 0.0
  %911 = vmatpush1.msra.mxu0 0.0
  %912 = vmatprep.subr.mxu0 0.0
  %913 = vmatpush1.msra.mxu0 0.0
  %914 = vmatprep.subr.mxu0 0.0
  %915 = vmatpush1.msra.mxu0 0.0
  %916 = vmatprep.subr.mxu0 0.0
  %917 = vmatpush1.msra.mxu0 0.0
  %918 = vmatprep.subr.mxu0 0.0
  %919 = vmatpush1.msra.mxu0 0.0
  %920 = vmatprep.subr.mxu0 0.0
  %921 = vmatpush1.msra.mxu0 0.0
  %922 = vmatprep.subr.mxu0 0.0
  %923 = vmatpush1.msra.mxu0 0.0
  %924 = vmatprep.mubr.f32.mxu0 0.0
  %925 = vmatmul.mubr.f32.gmra.mrb[0].mxu0 %v858
  %v926 = vpop.f32.mrb[0].mxu0
  %v927 = vadd.f32 %v854, %v926
  %v928 = vpop.f32.mrb[0].mxu0
  %929 = vdwg.mxu0
  %vm930 = vcmask 1041408
  %v931 = vsel %vm930, %v927, -inf
  %932 = vmax.xlane.f32.xlu0 %v931
  %v933 = vpop.xlane.xlu0 %932
  %v934 = vsub.f32 %v927, %v933
  %v935 = vmul.f32 %v934, 1.442695
  %v936 = vpow.pop %v935
  %v937 = vsel %vm930, %v936, 0.0
  %938 = vadd.xlane.f32.xlu0 %v937
  %v939 = vpop.xlane.xlu0 %938
  %v940 = vrcp.pop %v939
  %v941 = vmul.f32 %v936, %v940
  %v942 = vpack.c.bf16 %v941, %v941
  %943 = vst [vmem:[%s7] sm:$0x1] %v942
  // Predicated region
  $region30: #{_net_forward_jit.1} parent=0 // pred_check
    _
  $region31: #{_net_forward_jit.1} parent=0 // pred_check_branch
    %945 = sbr.rel (0) target = $region33
  $region32: #{_net_forward_jit.1} parent=0 // pred_region
    _
  $region33: #{_net_forward_jit.1} parent=0 // pred_fallthru
    _
  // Predicated region
  $region34: #{_net_forward_jit.1} parent=0 // pred_check
    _
  $region35: #{_net_forward_jit.1} parent=0 // pred_check_branch
    %947 = sbr.rel (0) target = $region37
  $region36: #{_net_forward_jit.1} parent=0 // pred_region
    _
  $region37: #{_net_forward_jit.1} parent=0 // pred_fallthru
    _

</llo_original>
